<compile_context>
chip_gen: v5e
topology: v5e:2x2
jax: 0.10.0
libtpu: 0.0.40
codegen_flags: <defaults>
</compile_context>

<pallas_src>
import jax
import jax.numpy as jnp
from jax.experimental import pallas as pl
from jax.experimental.pallas import tpu as pltpu

_LANE = 128
_BATCH_TILE_CAP = 4096  # rows per grid step at large B


def _round_up(x, m):
    return (x + m - 1) // m * m


def _decoder_kernel(z_ref,
                    w1_ref, b1_ref,
                    w2_ref, b2_ref,
                    w3_ref, b3_ref,
                    w4_ref, b4_ref,
                    o_ref):
    """Fused forward: 4 MXU matmuls (bf16 x bf16 -> f32 acc) + 3 Swish activations."""

    def linear(h_bf16, w_ref, b_ref):
        # bf16 operands on the MXU, f32 accumulation; f32 bias add on the VPU.
        return jnp.dot(h_bf16, w_ref[...],
                       preferred_element_type=jnp.float32) + b_ref[...]

    def swish(x):
        # sigmoid(x) = 1 / (1 + exp(-x)); exp and reciprocal both run on the
        # EUP slot (separate VLIW slot), keeping the VPU free.
        return x * pl.reciprocal(1.0 + jnp.exp(-x), approx=True)

    h = swish(linear(z_ref[...].astype(jnp.bfloat16), w1_ref, b1_ref))
    h = swish(linear(h.astype(jnp.bfloat16), w2_ref, b2_ref))
    h = swish(linear(h.astype(jnp.bfloat16), w3_ref, b3_ref))
    o_ref[...] = linear(h.astype(jnp.bfloat16), w4_ref, b4_ref)


def _choose_block_b(B):
    """Batch-tile rows: big enough to amortize the ~0.35us per-step overhead,
    and for large B at least 2 grid steps so v7x's two TensorCores both work."""
    if B <= 512:
        return B
    half = -(-B // 2)              # ceil(B / 2)
    half = -(-half // 8) * 8       # round up to a multiple of 8 sublanes
    return min(_BATCH_TILE_CAP, half)


def _vmem_limit_bytes(block_b, in_dim, img_p, params):
    """Scoped-VMEM request sized from the actual tile footprint."""
    io_bytes = 2 * block_b * in_dim * 4 + 2 * block_b * img_p * 4   # double-buffered z/out tiles
    weight_bytes = 2 * sum(int(v.size) * v.dtype.itemsize for v in params.values())
    inter_bytes = 4 * block_b * _LANE * 4                            # f32 intermediates
    total = io_bytes + weight_bytes + inter_bytes + (4 << 20)        # + headroom
    return int(min(max(total, 16 << 20), 48 << 20))                  # stay below v7x's 64 MiB


def image_decoder_forward(z, params, image_dim, *, block_b=None, return_padded=False):
    """Run the fused ImageDecoder forward pass.

    z:              (B, latent_dim + 1) float32, unpadded.
    params:         dict from init_params(): bf16 weights w1..w4 (w1 keeps its
                    true K; all output dims lane-padded to 128) + f32 biases.
    image_dim:      logical output width.
    return_padded:  if True, return the lane-padded (B, 128-multiple) output and
                    skip the post-kernel slice copy (preferred for perf when the
                    consumer can handle padding).
    """
    B, in_dim = z.shape
    assert in_dim == params["w1"].shape[0], "z feature dim must match fc1"
    img_p = params["w4"].shape[1]

    if block_b is None:
        block_b = _choose_block_b(B)
    block_b = min(block_b, B)
    grid = (pl.cdiv(B, block_b),)   # ragged last tile handled by Pallas

    weight_keys = ("w1", "b1", "w2", "b2", "w3", "b3", "w4", "b4")

    in_specs = [pl.BlockSpec((block_b, in_dim), lambda i: (i, 0))]
    # Constant index_map -> Pallas keeps each weight/bias block resident in
    # VMEM and does not re-DMA it across grid steps.
    in_specs += [pl.BlockSpec(params[k].shape, lambda i: (0, 0)) for k in weight_keys]
    out_spec = pl.BlockSpec((block_b, img_p), lambda i: (i, 0))

    out_p = pl.pallas_call(
        _decoder_kernel,
        out_shape=jax.ShapeDtypeStruct((B, img_p), jnp.float32),
        grid_spec=pltpu.PrefetchScalarGridSpec(
            num_scalar_prefetch=0,
            grid=grid,
            in_specs=in_specs,
            out_specs=out_spec,
        ),
        compiler_params=pltpu.CompilerParams(
            dimension_semantics=("parallel",),
            vmem_limit_bytes=_vmem_limit_bytes(block_b, in_dim, img_p, params),
        ),
    )(z, *(params[k] for k in weight_keys))

    if return_padded or img_p == image_dim:
        return out_p
    return out_p[:, :image_dim]


def init_params(key, image_dim, hidden_dim, latent_dim):
    """nn.Linear-style init, laid out for the TPU datapath.

    Returns (padded_params, raw_params):
      padded_params: bf16 weights (in, out_pad) + f32 biases (1, out_pad).
                     fc1 keeps its true input width (z is passed unpadded);
                     deeper layers pad their input width to the lane-padded
                     output width of the previous layer.  All padding is zero,
                     so padded lanes stay exactly zero through every layer.
      raw_params:    unpadded f32 weights/biases (for the module-semantics ref).
    PyTorch nn.Linear stores weight as (out, in); we store the transpose
    (in, out) so the kernel computes x @ W + b without an in-kernel transpose.
    """
    in_dim = latent_dim + 1
    dims = [
        (in_dim, hidden_dim),      # fc1
        (hidden_dim, hidden_dim),  # fc2
        (hidden_dim, hidden_dim),  # fc3
        (hidden_dim, image_dim),   # fc4
    ]
    padded, raw = {}, {}
    for idx, (fan_in, fan_out) in enumerate(dims, start=1):
        key, kw, kb = jax.random.split(key, 3)
        bound = 1.0 / (fan_in ** 0.5)
        w = jax.random.uniform(kw, (fan_in, fan_out), jnp.float32, -bound, bound)
        b = jax.random.uniform(kb, (1, fan_out), jnp.float32, -bound, bound)
        raw[f"w{idx}"], raw[f"b{idx}"] = w, b

        fi_p = fan_in if idx == 1 else _round_up(fan_in, _LANE)
        fo_p = _round_up(fan_out, _LANE)
        w_p = jnp.zeros((fi_p, fo_p), jnp.bfloat16)
        w_p = w_p.at[:fan_in, :fan_out].set(w.astype(jnp.bfloat16))
        b_p = jnp.zeros((1, fo_p), jnp.float32).at[:, :fan_out].set(b)
        padded[f"w{idx}"], padded[f"b{idx}"] = w_p, b_p
    return padded, raw


def reference_forward_same_math(z, padded_params, image_dim):
    """Pure-JAX reference replicating the kernel math (bf16 operands, f32 acc,
    sigmoid as 1/(1+exp(-x)) with an exact reciprocal)."""
    h = z
    for i in (1, 2, 3):
        h = jnp.dot(h.astype(jnp.bfloat16), padded_params[f"w{i}"],
                    preferred_element_type=jnp.float32) + padded_params[f"b{i}"]
        h = h * (1.0 / (1.0 + jnp.exp(-h)))
    out = jnp.dot(h.astype(jnp.bfloat16), padded_params["w4"],
                  preferred_element_type=jnp.float32) + padded_params["b4"]
    return out[:, :image_dim]


def reference_forward_f32(z, raw_params):
    """Mirrors the PyTorch module exactly in f32 (no padding, no bf16)."""
    h = z
    for i in (1, 2, 3):
        h = h @ raw_params[f"w{i}"] + raw_params[f"b{i}"]
        h = h * jax.nn.sigmoid(h)
    return h @ raw_params["w4"] + raw_params["b4"]


if __name__ == "__main__":
    # Small shapes consistent with the module:
    #   latent_dim=15 -> fc1 input = latent_dim + 1 = 16
    #   hidden_dim=32, image_dim=64, batch=8
    batch, latent_dim, hidden_dim, image_dim = 8, 15, 32, 64

    key = jax.random.PRNGKey(0)
    key, kz = jax.random.split(key)
    padded_params, raw_params = init_params(key, image_dim, hidden_dim, latent_dim)
    z = jax.random.normal(kz, (batch, latent_dim + 1), jnp.float32)

    out = image_decoder_forward(z, padded_params, image_dim)
    out = jax.block_until_ready(out)
    assert out.shape == (batch, image_dim)

    # Padded fast path (no post-kernel slice copy) agrees with the sliced one.
    out_padded = jax.block_until_ready(
        image_decoder_forward(z, padded_params, image_dim, return_padded=True))
    assert out_padded.shape == (batch, padded_params["w4"].shape[1])
    assert jnp.allclose(out, out_padded[:, :image_dim]), "padded/sliced mismatch"

    # 1) Same-math reference (bf16 operands, f32 accumulation); only the
    #    approximate EUP reciprocal in the kernel's sigmoid differs.
    ref_bf16 = reference_forward_same_math(z, padded_params, image_dim)
    assert jnp.allclose(out, ref_bf16, atol=1e-2, rtol=1e-2), "mismatch vs bf16 reference"

    # 2) Pure-f32 module semantics: bf16 weight rounding + approx sigmoid only.
    ref_f32 = reference_forward_f32(z, raw_params)
    assert jnp.allclose(out, ref_f32, atol=5e-2, rtol=5e-2), "mismatch vs f32 reference"

    print("KERNEL_OK")
</pallas_src>

<mosaic_0001>
module attributes {stable_mosaic.version = 11 : i64} {
  func.func @_decoder_kernel(%arg0: i32, %arg1: memref<8x16xf32, #tpu.memory_space<vmem>>, %arg2: memref<16x128xbf16, #tpu.memory_space<vmem>>, %arg3: memref<1x128xf32, #tpu.memory_space<vmem>>, %arg4: memref<128x128xbf16, #tpu.memory_space<vmem>>, %arg5: memref<1x128xf32, #tpu.memory_space<vmem>>, %arg6: memref<128x128xbf16, #tpu.memory_space<vmem>>, %arg7: memref<1x128xf32, #tpu.memory_space<vmem>>, %arg8: memref<128x128xbf16, #tpu.memory_space<vmem>>, %arg9: memref<1x128xf32, #tpu.memory_space<vmem>>, %arg10: memref<8x128xf32, #tpu.memory_space<vmem>>) attributes {dimension_semantics = [#tpu.dimension_semantics<parallel>], iteration_bounds = array<i64: 1>, scalar_prefetch = 0 : i64, scratch_operands = 0 : i64, tpu.core_type = #tpu.core_type<tc>, window_params = [{transform_indices = @transform_0, window_bounds = array<i64: 8, 16>}, {pipeline_mode = #tpu.pipeline_mode<synchronous>, transform_indices = @transform_1, window_bounds = array<i64: 16, 128>}, {pipeline_mode = #tpu.pipeline_mode<synchronous>, transform_indices = @transform_2, window_bounds = array<i64: 1, 128>}, {pipeline_mode = #tpu.pipeline_mode<synchronous>, transform_indices = @transform_3, window_bounds = array<i64: 128, 128>}, {pipeline_mode = #tpu.pipeline_mode<synchronous>, transform_indices = @transform_4, window_bounds = array<i64: 1, 128>}, {pipeline_mode = #tpu.pipeline_mode<synchronous>, transform_indices = @transform_5, window_bounds = array<i64: 128, 128>}, {pipeline_mode = #tpu.pipeline_mode<synchronous>, transform_indices = @transform_6, window_bounds = array<i64: 1, 128>}, {pipeline_mode = #tpu.pipeline_mode<synchronous>, transform_indices = @transform_7, window_bounds = array<i64: 128, 128>}, {pipeline_mode = #tpu.pipeline_mode<synchronous>, transform_indices = @transform_8, window_bounds = array<i64: 1, 128>}, {transform_indices = @transform_9, window_bounds = array<i64: 8, 128>}]} {
    %c0 = arith.constant 0 : index
    %c0_0 = arith.constant 0 : index
    %0 = vector.load %arg1[%c0, %c0_0] : memref<8x16xf32, #tpu.memory_space<vmem>>, vector<8x16xf32>
    %1 = arith.truncf %0 : vector<8x16xf32> to vector<8x16xbf16>
    %c0_1 = arith.constant 0 : index
    %c0_2 = arith.constant 0 : index
    %2 = vector.load %arg2[%c0_1, %c0_2] : memref<16x128xbf16, #tpu.memory_space<vmem>>, vector<16x128xbf16>
    %cst = arith.constant dense<0.000000e+00> : vector<8x128xf32>
    %3 = tpu.matmul %1, %2, %cst {dimension_numbers = #tpu.dot_dimension_numbers<[1], [0], [0], [1], [0, 0, 1, 1], [], []>} : vector<8x16xbf16>, vector<16x128xbf16>, vector<8x128xf32> -> vector<8x128xf32>
    %c0_3 = arith.constant 0 : index
    %c0_4 = arith.constant 0 : index
    %4 = vector.load %arg3[%c0_3, %c0_4] : memref<1x128xf32, #tpu.memory_space<vmem>>, vector<1x128xf32>
    %5 = vector.broadcast %4 : vector<1x128xf32> to vector<8x128xf32>
    %6 = arith.addf %3, %5 : vector<8x128xf32>
    %cst_5 = arith.constant 0.000000e+00 : f32
    %7 = vector.broadcast %cst_5 : f32 to vector<8x128xf32>
    %8 = arith.subf %7, %6 : vector<8x128xf32>
    %9 = math.exp %8 : vector<8x128xf32>
    %cst_6 = arith.constant 1.000000e+00 : f32
    %10 = vector.broadcast %cst_6 : f32 to vector<8x128xf32>
    %11 = arith.addf %10, %9 : vector<8x128xf32>
    %12 = tpu.reciprocal %11 {approx = true} : vector<8x128xf32> -> vector<8x128xf32>
    %13 = arith.mulf %6, %12 : vector<8x128xf32>
    %14 = arith.truncf %13 : vector<8x128xf32> to vector<8x128xbf16>
    %c0_7 = arith.constant 0 : index
    %c0_8 = arith.constant 0 : index
    %15 = vector.load %arg4[%c0_7, %c0_8] : memref<128x128xbf16, #tpu.memory_space<vmem>>, vector<128x128xbf16>
    %cst_9 = arith.constant dense<0.000000e+00> : vector<8x128xf32>
    %16 = tpu.matmul %14, %15, %cst_9 {dimension_numbers = #tpu.dot_dimension_numbers<[1], [0], [0], [1], [0, 0, 1, 1], [], []>} : vector<8x128xbf16>, vector<128x128xbf16>, vector<8x128xf32> -> vector<8x128xf32>
    %c0_10 = arith.constant 0 : index
    %c0_11 = arith.constant 0 : index
    %17 = vector.load %arg5[%c0_10, %c0_11] : memref<1x128xf32, #tpu.memory_space<vmem>>, vector<1x128xf32>
    %18 = vector.broadcast %17 : vector<1x128xf32> to vector<8x128xf32>
    %19 = arith.addf %16, %18 : vector<8x128xf32>
    %cst_12 = arith.constant 0.000000e+00 : f32
    %20 = vector.broadcast %cst_12 : f32 to vector<8x128xf32>
    %21 = arith.subf %20, %19 : vector<8x128xf32>
    %22 = math.exp %21 : vector<8x128xf32>
    %cst_13 = arith.constant 1.000000e+00 : f32
    %23 = vector.broadcast %cst_13 : f32 to vector<8x128xf32>
    %24 = arith.addf %23, %22 : vector<8x128xf32>
    %25 = tpu.reciprocal %24 {approx = true} : vector<8x128xf32> -> vector<8x128xf32>
    %26 = arith.mulf %19, %25 : vector<8x128xf32>
    %27 = arith.truncf %26 : vector<8x128xf32> to vector<8x128xbf16>
    %c0_14 = arith.constant 0 : index
    %c0_15 = arith.constant 0 : index
    %28 = vector.load %arg6[%c0_14, %c0_15] : memref<128x128xbf16, #tpu.memory_space<vmem>>, vector<128x128xbf16>
    %cst_16 = arith.constant dense<0.000000e+00> : vector<8x128xf32>
    %29 = tpu.matmul %27, %28, %cst_16 {dimension_numbers = #tpu.dot_dimension_numbers<[1], [0], [0], [1], [0, 0, 1, 1], [], []>} : vector<8x128xbf16>, vector<128x128xbf16>, vector<8x128xf32> -> vector<8x128xf32>
    %c0_17 = arith.constant 0 : index
    %c0_18 = arith.constant 0 : index
    %30 = vector.load %arg7[%c0_17, %c0_18] : memref<1x128xf32, #tpu.memory_space<vmem>>, vector<1x128xf32>
    %31 = vector.broadcast %30 : vector<1x128xf32> to vector<8x128xf32>
    %32 = arith.addf %29, %31 : vector<8x128xf32>
    %cst_19 = arith.constant 0.000000e+00 : f32
    %33 = vector.broadcast %cst_19 : f32 to vector<8x128xf32>
    %34 = arith.subf %33, %32 : vector<8x128xf32>
    %35 = math.exp %34 : vector<8x128xf32>
    %cst_20 = arith.constant 1.000000e+00 : f32
    %36 = vector.broadcast %cst_20 : f32 to vector<8x128xf32>
    %37 = arith.addf %36, %35 : vector<8x128xf32>
    %38 = tpu.reciprocal %37 {approx = true} : vector<8x128xf32> -> vector<8x128xf32>
    %39 = arith.mulf %32, %38 : vector<8x128xf32>
    %40 = arith.truncf %39 : vector<8x128xf32> to vector<8x128xbf16>
    %c0_21 = arith.constant 0 : index
    %c0_22 = arith.constant 0 : index
    %41 = vector.load %arg8[%c0_21, %c0_22] : memref<128x128xbf16, #tpu.memory_space<vmem>>, vector<128x128xbf16>
    %cst_23 = arith.constant dense<0.000000e+00> : vector<8x128xf32>
    %42 = tpu.matmul %40, %41, %cst_23 {dimension_numbers = #tpu.dot_dimension_numbers<[1], [0], [0], [1], [0, 0, 1, 1], [], []>} : vector<8x128xbf16>, vector<128x128xbf16>, vector<8x128xf32> -> vector<8x128xf32>
    %c0_24 = arith.constant 0 : index
    %c0_25 = arith.constant 0 : index
    %43 = vector.load %arg9[%c0_24, %c0_25] : memref<1x128xf32, #tpu.memory_space<vmem>>, vector<1x128xf32>
    %44 = vector.broadcast %43 : vector<1x128xf32> to vector<8x128xf32>
    %45 = arith.addf %42, %44 : vector<8x128xf32>
    %c0_26 = arith.constant 0 : index
    %c0_27 = arith.constant 0 : index
    %46 = vector.load %arg10[%c0_26, %c0_27] : memref<8x128xf32, #tpu.memory_space<vmem>>, vector<8x128xf32>
    tpu.vector_store %arg10[%c0_26, %c0_27], %45 {strides = array<i32>} : memref<8x128xf32, #tpu.memory_space<vmem>>, vector<8x128xf32>,
    return
  }
  func.func @transform_0(%arg0: i32) -> (i32, i32) {
    %c0_i32 = arith.constant 0 : i32
    %c0_i32_0 = arith.constant 0 : i32
    return %arg0, %c0_i32 : i32, i32
  }
  func.func @transform_1(%arg0: i32) -> (i32, i32) {
    %c0_i32 = arith.constant 0 : i32
    %c0_i32_0 = arith.constant 0 : i32
    %c0_i32_1 = arith.constant 0 : i32
    return %c0_i32, %c0_i32_0 : i32, i32
  }
  func.func @transform_2(%arg0: i32) -> (i32, i32) {
    %c0_i32 = arith.constant 0 : i32
    %c0_i32_0 = arith.constant 0 : i32
    %c0_i32_1 = arith.constant 0 : i32
    return %c0_i32, %c0_i32_0 : i32, i32
  }
  func.func @transform_3(%arg0: i32) -> (i32, i32) {
    %c0_i32 = arith.constant 0 : i32
    %c0_i32_0 = arith.constant 0 : i32
    %c0_i32_1 = arith.constant 0 : i32
    return %c0_i32, %c0_i32_0 : i32, i32
  }
  func.func @transform_4(%arg0: i32) -> (i32, i32) {
    %c0_i32 = arith.constant 0 : i32
    %c0_i32_0 = arith.constant 0 : i32
    %c0_i32_1 = arith.constant 0 : i32
    return %c0_i32, %c0_i32_0 : i32, i32
  }
  func.func @transform_5(%arg0: i32) -> (i32, i32) {
    %c0_i32 = arith.constant 0 : i32
    %c0_i32_0 = arith.constant 0 : i32
    %c0_i32_1 = arith.constant 0 : i32
    return %c0_i32, %c0_i32_0 : i32, i32
  }
  func.func @transform_6(%arg0: i32) -> (i32, i32) {
    %c0_i32 = arith.constant 0 : i32
    %c0_i32_0 = arith.constant 0 : i32
    %c0_i32_1 = arith.constant 0 : i32
    return %c0_i32, %c0_i32_0 : i32, i32
  }
  func.func @transform_7(%arg0: i32) -> (i32, i32) {
    %c0_i32 = arith.constant 0 : i32
    %c0_i32_0 = arith.constant 0 : i32
    %c0_i32_1 = arith.constant 0 : i32
    return %c0_i32, %c0_i32_0 : i32, i32
  }
  func.func @transform_8(%arg0: i32) -> (i32, i32) {
    %c0_i32 = arith.constant 0 : i32
    %c0_i32_0 = arith.constant 0 : i32
    %c0_i32_1 = arith.constant 0 : i32
    return %c0_i32, %c0_i32_0 : i32, i32
  }
  func.func @transform_9(%arg0: i32) -> (i32, i32) {
    %c0_i32 = arith.constant 0 : i32
    %c0_i32_0 = arith.constant 0 : i32
    return %arg0, %c0_i32 : i32, i32
  }
}

</mosaic_0001>

<llo_original>
// kernel: tpu_custom_call.1
$region0: #{tpu_custom_call.1}
  #allocation0 [shape = 'u32[]', space=smem, size = 0x4, offset = 0x4, fixed_abs, tag = 'smem constant byte address 0x4 - core index']
  #allocation1 [shape = 'u32[72,128]{1,0:T(1,128)}', space=vmem, size = 0x9000, scoped, tag = 'internal scratch']
  %s0 = inlined_call_operand.hbm [shape: f32[8,16], index: 0, kind: input, shape index: {}]
  %s1 = inlined_call_operand.hbm [shape: bf16[16,128], index: 1, kind: input, shape index: {}]
  %s2 = inlined_call_operand.vmem [shape: f32[1,128], index: 2, kind: input, shape index: {}]
  %s3 = inlined_call_operand.hbm [shape: bf16[128,128], index: 3, kind: input, shape index: {}]
  %s4 = inlined_call_operand.vmem [shape: f32[1,128], index: 4, kind: input, shape index: {}]
  %s5 = inlined_call_operand.hbm [shape: bf16[128,128], index: 5, kind: input, shape index: {}]
  %s6 = inlined_call_operand.vmem [shape: f32[1,128], index: 6, kind: input, shape index: {}]
  %s7 = inlined_call_operand.hbm [shape: bf16[128,128], index: 7, kind: input, shape index: {}]
  %s8 = inlined_call_operand.vmem [shape: f32[1,128], index: 8, kind: input, shape index: {}]
  %s9 = inlined_call_operand.hbm [shape: f32[8,128], index: 9, kind: output, shape index: {}]
  %s10 = sld [smem:[#allocation0]]
  $region66: #{tpu_custom_call.1} parent=0
    _
  %s12 = ssub.s32 1, %s10
  %s13 = scalar_select 0, %s12, %s10
  $region1: #{tpu_custom_call.1} parent=0
    #allocation2 [shape = 'u8[4096]{0}', space=vmem, size = 0x1000, scoped, tag = 'input window, operand 0, single buffered']
    #allocation3 [shape = 's32[1]{0}', space=sflag, size = 0x4, scoped, tag = 'scoped memory for tpu_custom_call.1']
    #allocation4 [shape = 's32[1]{0}', space=sflag, size = 0x4, scoped, tag = 'scoped memory for tpu_custom_call.1']
    #allocation5 [shape = 'u8[4096]{0}', space=vmem, size = 0x1000, scoped, tag = 'input window, operand 1, single buffered']
    #allocation6 [shape = 's32[1]{0}', space=sflag, size = 0x4, scoped, tag = 'scoped memory for tpu_custom_call.1']
    #allocation7 [shape = 'u8[32768]{0}', space=vmem, size = 0x8000, scoped, tag = 'input window, operand 3, single buffered']
    #allocation8 [shape = 'u8[32768]{0}', space=vmem, size = 0x8000, scoped, tag = 'input window, operand 5, single buffered']
    #allocation9 [shape = 's32[1]{0}', space=sflag, size = 0x4, scoped, tag = 'scoped memory for tpu_custom_call.1']
    #allocation10 [shape = 'u8[32768]{0}', space=vmem, size = 0x8000, scoped, tag = 'input window, operand 7, single buffered']
    #allocation11 [shape = 'u8[4096]{0}', space=vmem, size = 0x1000, scoped, tag = 'output window, operand 0, single buffered']
    %14 = vsyncpa [#allocation3], 0
    %15 = vsyncpa [#allocation6], 0
    %16 = vsyncpa [#allocation9], 0
    %17 = vsyncpa [#allocation4], 0
    // Predicated region
    $region2: #{tpu_custom_call.1} parent=1 // pred_check
      _
    $region3: #{tpu_custom_call.1} parent=1 // pred_check_branch
      %19 = sbr.rel (0) target = $region5
    $region4: #{tpu_custom_call.1} parent=1 // pred_region
      %21 = vsyncadd [#allocation3], 0
      %s23 = sshll.u32 %s0, 4
      %s24 = int_to_ptr.hbm [resolvable:$true] %s23
      %s25 = sshll.u32 [#allocation2], 4
      %s26 = int_to_ptr.vmem [resolvable:$true] %s25
      %28 = dma.hbm_to_vmem [thread:$0]  %s24, 128, %s26, [#allocation3]
    $region5: #{tpu_custom_call.1} parent=1 // pred_fallthru
      _
    // Predicated region
    $region6: #{tpu_custom_call.1} parent=1 // pred_check
      _
    $region7: #{tpu_custom_call.1} parent=1 // pred_check_branch
      %30 = sbr.rel (0) target = $region9
    $region8: #{tpu_custom_call.1} parent=1 // pred_region
      %32 = vsyncadd [#allocation6], 0
      %s33 = sshll.u32 %s1, 4
      %s34 = int_to_ptr.hbm [resolvable:$true] %s33
      %s35 = sshll.u32 [#allocation5], 4
      %s36 = int_to_ptr.vmem [resolvable:$true] %s35
      %41 = dma.hbm_to_vmem [thread:$0]  %s34, 128, %s36, [#allocation6], 64, 64, 4
    $region9: #{tpu_custom_call.1} parent=1 // pred_fallthru
      _
    // Predicated region
    $region10: #{tpu_custom_call.1} parent=1 // pred_check
      _
    $region11: #{tpu_custom_call.1} parent=1 // pred_check_branch
      %43 = sbr.rel (0) target = $region13
    $region12: #{tpu_custom_call.1} parent=1 // pred_region
      _
    $region13: #{tpu_custom_call.1} parent=1 // pred_fallthru
      _
    // Predicated region
    $region14: #{tpu_custom_call.1} parent=1 // pred_check
      _
    $region15: #{tpu_custom_call.1} parent=1 // pred_check_branch
      %45 = sbr.rel (0) target = $region17
    $region16: #{tpu_custom_call.1} parent=1 // pred_region
      %47 = vsyncadd [#allocation6], 0
      %s48 = sshll.u32 %s3, 4
      %s49 = int_to_ptr.hbm [resolvable:$true] %s48
      %s50 = sshll.u32 [#allocation7], 4
      %s51 = int_to_ptr.vmem [resolvable:$true] %s50
      %56 = dma.hbm_to_vmem [thread:$0]  %s49, 1024, %s51, [#allocation6], 64, 64, 4
    $region17: #{tpu_custom_call.1} parent=1 // pred_fallthru
      _
    // Predicated region
    $region18: #{tpu_custom_call.1} parent=1 // pred_check
      _
    $region19: #{tpu_custom_call.1} parent=1 // pred_check_branch
      %58 = sbr.rel (0) target = $region21
    $region20: #{tpu_custom_call.1} parent=1 // pred_region
      _
    $region21: #{tpu_custom_call.1} parent=1 // pred_fallthru
      _
    // Predicated region
    $region22: #{tpu_custom_call.1} parent=1 // pred_check
      _
    $region23: #{tpu_custom_call.1} parent=1 // pred_check_branch
      %60 = sbr.rel (0) target = $region25
    $region24: #{tpu_custom_call.1} parent=1 // pred_region
      %62 = vsyncadd [#allocation9], 0
      %s63 = sshll.u32 %s5, 4
      %s64 = int_to_ptr.hbm [resolvable:$true] %s63
      %s65 = sshll.u32 [#allocation8], 4
      %s66 = int_to_ptr.vmem [resolvable:$true] %s65
      %71 = dma.hbm_to_vmem [thread:$0]  %s64, 1024, %s66, [#allocation9], 64, 64, 4
    $region25: #{tpu_custom_call.1} parent=1 // pred_fallthru
      _
    // Predicated region
    $region26: #{tpu_custom_call.1} parent=1 // pred_check
      _
    $region27: #{tpu_custom_call.1} parent=1 // pred_check_branch
      %73 = sbr.rel (0) target = $region29
    $region28: #{tpu_custom_call.1} parent=1 // pred_region
      _
    $region29: #{tpu_custom_call.1} parent=1 // pred_fallthru
      _
    // Predicated region
    $region30: #{tpu_custom_call.1} parent=1 // pred_check
      _
    $region31: #{tpu_custom_call.1} parent=1 // pred_check_branch
      %75 = sbr.rel (0) target = $region33
    $region32: #{tpu_custom_call.1} parent=1 // pred_region
      %77 = vsyncadd [#allocation9], 0
      %s78 = sshll.u32 %s7, 4
      %s79 = int_to_ptr.hbm [resolvable:$true] %s78
      %s80 = sshll.u32 [#allocation10], 4
      %s81 = int_to_ptr.vmem [resolvable:$true] %s80
      %86 = dma.hbm_to_vmem [thread:$0]  %s79, 1024, %s81, [#allocation9], 64, 64, 4
    $region33: #{tpu_custom_call.1} parent=1 // pred_fallthru
      _
    // Predicated region
    $region34: #{tpu_custom_call.1} parent=1 // pred_check
      _
    $region35: #{tpu_custom_call.1} parent=1 // pred_check_branch
      %88 = sbr.rel (0) target = $region37
    $region36: #{tpu_custom_call.1} parent=1 // pred_region
      _
    $region37: #{tpu_custom_call.1} parent=1 // pred_fallthru
      _
    // Predicated region
    $region38: #{tpu_custom_call.1} parent=1 // pred_check
      _
    $region39: #{tpu_custom_call.1} parent=1 // pred_check_branch
      %90 = sbr.rel (0) target = $region41
    $region40: #{tpu_custom_call.1} parent=1 // pred_region
      %92 = dma.done [#allocation3], 128
    $region41: #{tpu_custom_call.1} parent=1 // pred_fallthru
      _
    // Predicated region
    $region42: #{tpu_custom_call.1} parent=1 // pred_check
      _
    $region43: #{tpu_custom_call.1} parent=1 // pred_check_branch
      %94 = sbr.rel (0) target = $region45
    $region44: #{tpu_custom_call.1} parent=1 // pred_region
      %96 = dma.done [#allocation6], 128
    $region45: #{tpu_custom_call.1} parent=1 // pred_fallthru
      _
    // Predicated region
    $region46: #{tpu_custom_call.1} parent=1 // pred_check
      _
    $region47: #{tpu_custom_call.1} parent=1 // pred_check_branch
      %98 = sbr.rel (0) target = $region49
    $region48: #{tpu_custom_call.1} parent=1 // pred_region
      %100 = dma.done [#allocation6], 1024
    $region49: #{tpu_custom_call.1} parent=1 // pred_fallthru
      _
    // Predicated region
    $region50: #{tpu_custom_call.1} parent=1 // pred_check
      _
    $region51: #{tpu_custom_call.1} parent=1 // pred_check_branch
      %102 = sbr.rel (0) target = $region53
    $region52: #{tpu_custom_call.1} parent=1 // pred_region
      %104 = dma.done [#allocation9], 1024
    $region53: #{tpu_custom_call.1} parent=1 // pred_fallthru
      _
    // Predicated region
    $region54: #{tpu_custom_call.1} parent=1 // pred_check
      _
    $region55: #{tpu_custom_call.1} parent=1 // pred_check_branch
      %106 = sbr.rel (0) target = $region57
    $region56: #{tpu_custom_call.1} parent=1 // pred_region
      %108 = dma.done [#allocation9], 1024
    $region57: #{tpu_custom_call.1} parent=1 // pred_fallthru
      _
    %v110 = vld [vmem:[#allocation2] sm:$0xff]
    %v111 = vpack.c.bf16 %v110, %v110
    %v112 = vld [vmem:[#allocation5] sm:$0xf]
    %v113 = vld [vmem:[#allocation5 + $0x4] sm:$0xf]
    %v114 = vld [vmem:[%s2] sm:$0x1]
    %v116 = vperm.slane %v114, 0
    %v120 = vunpack.c.l.b16 %v112
    %v121 = vunpack.c.l.b16 %v113
    %v122 = vpack.c.b16 %v121, %v120
    %vm124 = vcmask 130048
    %v126 = vsel %vm124, %v111, 0
    %128 = vmatpush.bf16.msra.mxu0 0
    %129 = vmatpush.bf16.msra.mxu0 0
    %130 = vmatpush.bf16.msra.mxu0 0
    %131 = vmatpush.bf16.msra.mxu0 0
    %132 = vmatpush.bf16.msra.mxu0 0
    %133 = vmatpush.bf16.msra.mxu0 0
    %134 = vmatpush.bf16.msra.mxu0 0
    %135 = vmatpush.bf16.msra.mxu0 %v122
    %136 = vmatmul.bf16.gmra.mxu0 %v126
    %v137 = vpop.f32.mrf.mxu0
    %v138 = vadd.f32 %v116, %v137
    %v139 = vpop.f32.mrf.mxu0
    %140 = vdwg.mxu0
    %v141 = vsub.f32 0.0, %v138
    %v142 = vmul.f32 %v141, 1.442695
    %v143 = vpow.pop %v142
    %v144 = vadd.f32 %v143, 1.0
    %v145 = vrcp.pop %v144
    %v146 = vmul.f32 %v138, %v145
    %v147 = vpack.c.bf16 %v146, %v146
    %v148 = vld [vmem:[#allocation7] sm:$0xf]
    %v149 = vld [vmem:[#allocation7 + $0x4] sm:$0xf]
    %v150 = vld [vmem:[#allocation7 + $0x8] sm:$0xf]
    %v151 = vld [vmem:[#allocation7 + $0xc] sm:$0xf]
    %v152 = vld [vmem:[#allocation7 + $0x10] sm:$0xf]
    %v153 = vld [vmem:[#allocation7 + $0x14] sm:$0xf]
    %v154 = vld [vmem:[#allocation7 + $0x18] sm:$0xf]
    %v155 = vld [vmem:[#allocation7 + $0x1c] sm:$0xf]
    %v156 = vld [vmem:[#allocation7 + $0x20] sm:$0xf]
    %v157 = vld [vmem:[#allocation7 + $0x24] sm:$0xf]
    %v158 = vld [vmem:[#allocation7 + $0x28] sm:$0xf]
    %v159 = vld [vmem:[#allocation7 + $0x2c] sm:$0xf]
    %v160 = vld [vmem:[#allocation7 + $0x30] sm:$0xf]
    %v161 = vld [vmem:[#allocation7 + $0x34] sm:$0xf]
    %v162 = vld [vmem:[#allocation7 + $0x38] sm:$0xf]
    %v163 = vld [vmem:[#allocation7 + $0x3c] sm:$0xf]
    %v164 = vld [vmem:[%s4] sm:$0x1]
    %v166 = vperm.slane %v164, 0
    %v184 = vunpack.c.l.b16 %v148
    %v185 = vunpack.c.l.b16 %v149
    %v186 = vunpack.c.l.b16 %v150
    %v187 = vunpack.c.l.b16 %v151
    %v188 = vunpack.c.l.b16 %v152
    %v189 = vunpack.c.l.b16 %v153
    %v190 = vunpack.c.l.b16 %v154
    %v191 = vunpack.c.l.b16 %v155
    %v192 = vunpack.c.l.b16 %v156
    %v193 = vunpack.c.l.b16 %v157
    %v194 = vunpack.c.l.b16 %v158
    %v195 = vunpack.c.l.b16 %v159
    %v196 = vunpack.c.l.b16 %v160
    %v197 = vunpack.c.l.b16 %v161
    %v198 = vunpack.c.l.b16 %v162
    %v199 = vunpack.c.l.b16 %v163
    %v200 = vpack.c.b16 %v185, %v184
    %v201 = vpack.c.b16 %v187, %v186
    %v202 = vpack.c.b16 %v189, %v188
    %v203 = vpack.c.b16 %v191, %v190
    %v204 = vpack.c.b16 %v193, %v192
    %v205 = vpack.c.b16 %v195, %v194
    %v206 = vpack.c.b16 %v197, %v196
    %v207 = vpack.c.b16 %v199, %v198
    %216 = vmatpush.bf16.msra.mxu0 %v207
    %217 = vmatpush.bf16.msra.mxu0 %v206
    %218 = vmatpush.bf16.msra.mxu0 %v205
    %219 = vmatpush.bf16.msra.mxu0 %v204
    %220 = vmatpush.bf16.msra.mxu0 %v203
    %221 = vmatpush.bf16.msra.mxu0 %v202
    %222 = vmatpush.bf16.msra.mxu0 %v201
    %223 = vmatpush.bf16.msra.mxu0 %v200
    %224 = vmatmul.bf16.gmra.mxu0 %v147
    %v225 = vpop.f32.mrf.mxu0
    %v226 = vadd.f32 %v166, %v225
    %v227 = vpop.f32.mrf.mxu0
    %228 = vdwg.mxu0
    %v229 = vsub.f32 0.0, %v226
    %v230 = vmul.f32 %v229, 1.442695
    %v231 = vpow.pop %v230
    %v232 = vadd.f32 %v231, 1.0
    %v233 = vrcp.pop %v232
    %v234 = vmul.f32 %v226, %v233
    %v235 = vpack.c.bf16 %v234, %v234
    %v236 = vld [vmem:[#allocation8] sm:$0xf]
    %v237 = vld [vmem:[#allocation8 + $0x4] sm:$0xf]
    %v238 = vld [vmem:[#allocation8 + $0x8] sm:$0xf]
    %v239 = vld [vmem:[#allocation8 + $0xc] sm:$0xf]
    %v240 = vld [vmem:[#allocation8 + $0x10] sm:$0xf]
    %v241 = vld [vmem:[#allocation8 + $0x14] sm:$0xf]
    %v242 = vld [vmem:[#allocation8 + $0x18] sm:$0xf]
    %v243 = vld [vmem:[#allocation8 + $0x1c] sm:$0xf]
    %v244 = vld [vmem:[#allocation8 + $0x20] sm:$0xf]
    %v245 = vld [vmem:[#allocation8 + $0x24] sm:$0xf]
    %v246 = vld [vmem:[#allocation8 + $0x28] sm:$0xf]
    %v247 = vld [vmem:[#allocation8 + $0x2c] sm:$0xf]
    %v248 = vld [vmem:[#allocation8 + $0x30] sm:$0xf]
    %v249 = vld [vmem:[#allocation8 + $0x34] sm:$0xf]
    %v250 = vld [vmem:[#allocation8 + $0x38] sm:$0xf]
    %v251 = vld [vmem:[#allocation8 + $0x3c] sm:$0xf]
    %v252 = vld [vmem:[%s6] sm:$0x1]
    %v254 = vperm.slane %v252, 0
    %v272 = vunpack.c.l.b16 %v236
    %v273 = vunpack.c.l.b16 %v237
    %v274 = vunpack.c.l.b16 %v238
    %v275 = vunpack.c.l.b16 %v239
    %v276 = vunpack.c.l.b16 %v240
    %v277 = vunpack.c.l.b16 %v241
    %v278 = vunpack.c.l.b16 %v242
    %v279 = vunpack.c.l.b16 %v243
    %v280 = vunpack.c.l.b16 %v244
    %v281 = vunpack.c.l.b16 %v245
    %v282 = vunpack.c.l.b16 %v246
    %v283 = vunpack.c.l.b16 %v247
    %v284 = vunpack.c.l.b16 %v248
    %v285 = vunpack.c.l.b16 %v249
    %v286 = vunpack.c.l.b16 %v250
    %v287 = vunpack.c.l.b16 %v251
    %v288 = vpack.c.b16 %v273, %v272
    %v289 = vpack.c.b16 %v275, %v274
    %v290 = vpack.c.b16 %v277, %v276
    %v291 = vpack.c.b16 %v279, %v278
    %v292 = vpack.c.b16 %v281, %v280
    %v293 = vpack.c.b16 %v283, %v282
    %v294 = vpack.c.b16 %v285, %v284
    %v295 = vpack.c.b16 %v287, %v286
    %304 = vmatpush.bf16.msra.mxu0 %v295
    %305 = vmatpush.bf16.msra.mxu0 %v294
    %306 = vmatpush.bf16.msra.mxu0 %v293
    %307 = vmatpush.bf16.msra.mxu0 %v292
    %308 = vmatpush.bf16.msra.mxu0 %v291
    %309 = vmatpush.bf16.msra.mxu0 %v290
    %310 = vmatpush.bf16.msra.mxu0 %v289
    %311 = vmatpush.bf16.msra.mxu0 %v288
    %312 = vmatmul.bf16.gmra.mxu0 %v235
    %v313 = vpop.f32.mrf.mxu0
    %v314 = vadd.f32 %v254, %v313
    %v315 = vpop.f32.mrf.mxu0
    %316 = vdwg.mxu0
    %v317 = vsub.f32 0.0, %v314
    %v318 = vmul.f32 %v317, 1.442695
    %v319 = vpow.pop %v318
    %v320 = vadd.f32 %v319, 1.0
    %v321 = vrcp.pop %v320
    %v322 = vmul.f32 %v314, %v321
    %v323 = vpack.c.bf16 %v322, %v322
    %v324 = vld [vmem:[#allocation10] sm:$0xf]
    %v325 = vld [vmem:[#allocation10 + $0x4] sm:$0xf]
    %v326 = vld [vmem:[#allocation10 + $0x8] sm:$0xf]
    %v327 = vld [vmem:[#allocation10 + $0xc] sm:$0xf]
    %v328 = vld [vmem:[#allocation10 + $0x10] sm:$0xf]
    %v329 = vld [vmem:[#allocation10 + $0x14] sm:$0xf]
    %v330 = vld [vmem:[#allocation10 + $0x18] sm:$0xf]
    %v331 = vld [vmem:[#allocation10 + $0x1c] sm:$0xf]
    %v332 = vld [vmem:[#allocation10 + $0x20] sm:$0xf]
    %v333 = vld [vmem:[#allocation10 + $0x24] sm:$0xf]
    %v334 = vld [vmem:[#allocation10 + $0x28] sm:$0xf]
    %v335 = vld [vmem:[#allocation10 + $0x2c] sm:$0xf]
    %v336 = vld [vmem:[#allocation10 + $0x30] sm:$0xf]
    %v337 = vld [vmem:[#allocation10 + $0x34] sm:$0xf]
    %v338 = vld [vmem:[#allocation10 + $0x38] sm:$0xf]
    %v339 = vld [vmem:[#allocation10 + $0x3c] sm:$0xf]
    %v340 = vld [vmem:[%s8] sm:$0x1]
    %v342 = vperm.slane %v340, 0
    %v360 = vunpack.c.l.b16 %v324
    %v361 = vunpack.c.l.b16 %v325
    %v362 = vunpack.c.l.b16 %v326
    %v363 = vunpack.c.l.b16 %v327
    %v364 = vunpack.c.l.b16 %v328
    %v365 = vunpack.c.l.b16 %v329
    %v366 = vunpack.c.l.b16 %v330
    %v367 = vunpack.c.l.b16 %v331
    %v368 = vunpack.c.l.b16 %v332
    %v369 = vunpack.c.l.b16 %v333
    %v370 = vunpack.c.l.b16 %v334
    %v371 = vunpack.c.l.b16 %v335
    %v372 = vunpack.c.l.b16 %v336
    %v373 = vunpack.c.l.b16 %v337
    %v374 = vunpack.c.l.b16 %v338
    %v375 = vunpack.c.l.b16 %v339
    %v376 = vpack.c.b16 %v361, %v360
    %v377 = vpack.c.b16 %v363, %v362
    %v378 = vpack.c.b16 %v365, %v364
    %v379 = vpack.c.b16 %v367, %v366
    %v380 = vpack.c.b16 %v369, %v368
    %v381 = vpack.c.b16 %v371, %v370
    %v382 = vpack.c.b16 %v373, %v372
    %v383 = vpack.c.b16 %v375, %v374
    %392 = vmatpush.bf16.msra.mxu0 %v383
    %393 = vmatpush.bf16.msra.mxu0 %v382
    %394 = vmatpush.bf16.msra.mxu0 %v381
    %395 = vmatpush.bf16.msra.mxu0 %v380
    %396 = vmatpush.bf16.msra.mxu0 %v379
    %397 = vmatpush.bf16.msra.mxu0 %v378
    %398 = vmatpush.bf16.msra.mxu0 %v377
    %399 = vmatpush.bf16.msra.mxu0 %v376
    %400 = vmatmul.bf16.gmra.mxu0 %v323
    %v401 = vpop.f32.mrf.mxu0
    %v402 = vadd.f32 %v342, %v401
    %v403 = vpop.f32.mrf.mxu0
    %404 = vdwg.mxu0
    %405 = vst [vmem:[#allocation11] sm:$0xff] %v402
    // Predicated region
    $region58: #{tpu_custom_call.1} parent=1 // pred_check
      _
    $region59: #{tpu_custom_call.1} parent=1 // pred_check_branch
      %407 = sbr.rel (0) target = $region61
    $region60: #{tpu_custom_call.1} parent=1 // pred_region
      %409 = vsyncadd [#allocation4], 0
      %s411 = sshll.u32 [#allocation11], 4
      %s412 = int_to_ptr.vmem [resolvable:$true] %s411
      %s413 = sshll.u32 %s9, 4
      %s414 = int_to_ptr.hbm [resolvable:$true] %s413
      %416 = dma.vmem_to_hbm [thread:$0]  %s412, 128, %s414, [#allocation4]
    $region61: #{tpu_custom_call.1} parent=1 // pred_fallthru
      _
    // Predicated region
    $region62: #{tpu_custom_call.1} parent=1 // pred_check
      _
    $region63: #{tpu_custom_call.1} parent=1 // pred_check_branch
      %418 = sbr.rel (0) target = $region65
    $region64: #{tpu_custom_call.1} parent=1 // pred_region
      %420 = dma.done [#allocation4], 128
    $region65: #{tpu_custom_call.1} parent=1 // pred_fallthru
      _
    %421 = vsyncpa [#allocation3], 1
    %422 = vsyncpa [#allocation6], 1
    %423 = vsyncpa [#allocation9], 1
    %424 = vsyncpa [#allocation4], 1

</llo_original>
